<compile_context>
chip_gen: v5e
topology: v5e:2x2
jax: 0.10.0
libtpu: 0.0.40
codegen_flags: <defaults>
</compile_context>

<pallas_src>
import functools

import jax
import jax.numpy as jnp
from jax.experimental import pallas as pl
from jax.experimental.pallas import tpu as pltpu


def _l1_kernel(x_ref, y_ref, o_ref, *, br, spc, nblocks, rows_valid, needs_mask):
    """One grid step of the tiled L1 reduction.

    x_ref / y_ref : (br, 128) tile of the flattened operands (original dtype)
    o_ref         : (8, 128) f32 per-core partial-sum block, resident across
                    the inner ("arbitrary") grid axis.
    """
    c = pl.program_id(0)   # TensorCore split ("parallel")
    i = pl.program_id(1)   # reduction steps within a core ("arbitrary")

    @pl.when(i == 0)
    def _():
        o_ref[...] = jnp.zeros_like(o_ref)

    # |x - y| in the input dtype (native bf16 VALU on v6e/v7x), widened to
    # f32 only for accumulation.
    d = jnp.abs(x_ref[...] - y_ref[...]).astype(jnp.float32)

    def accumulate(tile):
        # (br,128) -> (br//8, 8, 128) splits whole (8,128) vregs off the
        # sublane-major axis (layout-free); the axis-0 sum is pure VALU vreg
        # adds into the resident accumulator -- no per-step XLU reduce.
        o_ref[...] += jnp.sum(tile.reshape(br // 8, 8, 128), axis=0)

    if not needs_mask:
        accumulate(d)
    else:
        gi = c * spc + i                 # intended (unclamped) global block idx
        on_tail = gi >= nblocks - 1      # partial last block or clamped duplicate

        @pl.when(jnp.logical_not(on_tail))
        def _():
            accumulate(d)

        @pl.when(on_tail)
        def _():
            row = jax.lax.broadcasted_iota(jnp.int32, (br, 128), 0) + gi * br
            accumulate(jnp.where(row < rows_valid, d, 0.0))


def l1_loss(data, label, factor=1.0, *, block_bytes=2 << 20):
    """factor * mean(|data - label|)  (== factor * torch.nn.L1Loss()(data, label))."""
    # TODO(synk): only the default reduction='mean' of torch.nn.L1Loss(**kwargs)
    # is implemented; 'sum'/'none' reductions are not handled here.
    assert data.shape == label.shape, (data.shape, label.shape)
    n = data.size
    dt = jnp.promote_types(data.dtype, label.dtype)
    itemsize = jnp.dtype(dt).itemsize

    xf = data.astype(dt).reshape(-1)
    yf = label.astype(dt).reshape(-1)

    # Lane-dense (rows, 128) view.  Only ragged sizes (n % 1024 != 0) need a
    # small zero pad (|0-0| = 0 is sum-neutral); multiples of 8*128 reshape
    # for free, so large tensors incur no extra HBM round-trip.
    n_pad = pl.cdiv(n, 8 * 128) * (8 * 128)
    if n_pad != n:
        xf = jnp.pad(xf, (0, n_pad - n))
        yf = jnp.pad(yf, (0, n_pad - n))
    rows = n_pad // 128                       # multiple of 8
    x2 = xf.reshape(rows, 128)
    y2 = yf.reshape(rows, 128)

    # Tile rows: ~block_bytes per operand per step (4096 rows f32 / 8192 bf16
    # at the 2 MiB default).  2 operands x 2 pipeline buffers x 2 MiB = 8 MiB,
    # comfortably under the default scoped VMEM on v5e / v6e / v7x.
    br = max(8, (block_bytes // (128 * itemsize)) // 8 * 8)
    br = min(br, rows)

    ncores = 2                                # v7x megacore split; serial 2-way on v5e/v6e
    nblocks = pl.cdiv(rows, br)
    spc = pl.cdiv(nblocks, ncores)            # reduction steps per core
    needs_mask = (ncores * spc * br != rows)  # any partial / duplicate blocks?

    def in_map(c, i):
        # Clamp so no block index is fully out of range; clamped duplicates
        # are zeroed by the in-kernel tail mask.
        return (jnp.minimum(c * spc + i, nblocks - 1), 0)

    kern = functools.partial(
        _l1_kernel, br=br, spc=spc, nblocks=nblocks, rows_valid=rows,
        needs_mask=needs_mask)

    partials = pl.pallas_call(
        kern,
        out_shape=jax.ShapeDtypeStruct((ncores * 8, 128), jnp.float32),
        grid_spec=pltpu.PrefetchScalarGridSpec(
            num_scalar_prefetch=0,
            grid=(ncores, spc),
            in_specs=[pl.BlockSpec((br, 128), in_map),
                      pl.BlockSpec((br, 128), in_map)],
            out_specs=pl.BlockSpec((8, 128), lambda c, i: (c, 0))),
        compiler_params=pltpu.CompilerParams(
            dimension_semantics=("parallel", "arbitrary")),
        cost_estimate=pl.CostEstimate(
            flops=3 * n,
            transcendentals=0,
            bytes_accessed=2 * n * itemsize + ncores * 8 * 128 * 4),
    )(x2, y2)

    # Tiny final reduce + scale on a (16,128) array; divides by the true n.
    return jnp.sum(partials) * (float(factor) / float(n))


if __name__ == "__main__":
    key = jax.random.PRNGKey(0)
    k1, k2, k3, k4, k5, k6, k7, k8 = jax.random.split(key, 8)

    # --- Test 1: small NCHW-style inputs, factor != 1, single block ----------
    factor = 2.0
    x = jax.random.normal(k1, (2, 4, 16, 16), jnp.float32)
    y = jax.random.normal(k2, (2, 4, 16, 16), jnp.float32)
    loss = jax.block_until_ready(l1_loss(x, y, factor))
    ref = factor * jnp.mean(jnp.abs(x - y))
    assert jnp.allclose(loss, ref, rtol=1e-5, atol=1e-6), (loss, ref)

    # --- Test 2: ragged size (zero pad) + exact 2-core block split -----------
    xr = jax.random.normal(k3, (3, 5, 7, 13), jnp.float32)    # 1365 elements
    yr = jax.random.normal(k4, (3, 5, 7, 13), jnp.float32)
    loss_r = jax.block_until_ready(l1_loss(xr, yr, 0.5, block_bytes=8 * 128 * 4))
    ref_r = 0.5 * jnp.mean(jnp.abs(xr - yr))
    assert jnp.allclose(loss_r, ref_r, rtol=1e-5, atol=1e-6), (loss_r, ref_r)

    # --- Test 3: partial last block + clamped duplicate block (tail masking) -
    xm = jax.random.normal(k5, (5, 1000), jnp.float32)         # 5000 -> 40 rows
    ym = jax.random.normal(k6, (5, 1000), jnp.float32)
    loss_m = jax.block_until_ready(l1_loss(xm, ym, 1.0, block_bytes=16 * 128 * 4))
    ref_m = jnp.mean(jnp.abs(xm - ym))
    assert jnp.allclose(loss_m, ref_m, rtol=1e-5, atol=1e-6), (loss_m, ref_m)

    # --- Test 4: bf16 inputs (original dtype through DMA, bf16 |x-y|) --------
    xb = jax.random.normal(k7, (2, 4, 16, 16), jnp.float32).astype(jnp.bfloat16)
    yb = jax.random.normal(k8, (2, 4, 16, 16), jnp.float32).astype(jnp.bfloat16)
    loss_b = jax.block_until_ready(l1_loss(xb, yb, 1.0))
    ref_b = jnp.mean(jnp.abs(xb.astype(jnp.float32) - yb.astype(jnp.float32)))
    assert jnp.allclose(loss_b, ref_b, rtol=2e-2, atol=1e-3), (loss_b, ref_b)

    print("KERNEL_OK")
</pallas_src>

<mosaic_0001>
module attributes {stable_mosaic.version = 11 : i64} {
  func.func @_l1_kernel(%arg0: i32, %arg1: i32, %arg2: memref<16x128xf32, #tpu.memory_space<vmem>>, %arg3: memref<16x128xf32, #tpu.memory_space<vmem>>, %arg4: memref<8x128xf32, #tpu.memory_space<vmem>>) attributes {dimension_semantics = [#tpu.dimension_semantics<parallel>, #tpu.dimension_semantics<arbitrary>], iteration_bounds = array<i64: 2, 1>, scalar_prefetch = 0 : i64, scratch_operands = 0 : i64, tpu.core_type = #tpu.core_type<tc>, window_params = [{transform_indices = @transform_0, window_bounds = array<i64: 16, 128>}, {transform_indices = @transform_1, window_bounds = array<i64: 16, 128>}, {transform_indices = @transform_2, window_bounds = array<i64: 8, 128>}]} {
    %c0_i32 = arith.constant 0 : i32
    %0 = arith.cmpi eq, %arg1, %c0_i32 : i32
    %1 = arith.extui %0 : i1 to i32
    %c0_i32_0 = arith.constant 0 : i32
    %2 = arith.cmpi ne, %1, %c0_i32_0 : i32
    scf.if %2 {
      %cst = arith.constant 0.000000e+00 : f32
      %15 = vector.broadcast %cst : f32 to vector<8x128xf32>
      %c0_7 = arith.constant 0 : index
      %c0_8 = arith.constant 0 : index
      %16 = vector.load %arg4[%c0_7, %c0_8] : memref<8x128xf32, #tpu.memory_space<vmem>>, vector<8x128xf32>
      tpu.vector_store %arg4[%c0_7, %c0_8], %15 {strides = array<i32>} : memref<8x128xf32, #tpu.memory_space<vmem>>, vector<8x128xf32>,
    } else {
    }
    %c0 = arith.constant 0 : index
    %c0_1 = arith.constant 0 : index
    %3 = vector.load %arg2[%c0, %c0_1] : memref<16x128xf32, #tpu.memory_space<vmem>>, vector<16x128xf32>
    %c0_2 = arith.constant 0 : index
    %c0_3 = arith.constant 0 : index
    %4 = vector.load %arg3[%c0_2, %c0_3] : memref<16x128xf32, #tpu.memory_space<vmem>>, vector<16x128xf32>
    %5 = arith.subf %3, %4 : vector<16x128xf32>
    %6 = math.absf %5 : vector<16x128xf32>
    %c1_i32 = arith.constant 1 : i32
    %7 = arith.muli %arg0, %c1_i32 : i32
    %8 = arith.addi %7, %arg1 : i32
    %c0_i32_4 = arith.constant 0 : i32
    %9 = arith.cmpi sge, %8, %c0_i32_4 : i32
    %true = arith.constant true
    %10 = arith.xori %9, %true : i1
    %11 = arith.extui %10 : i1 to i32
    %c0_i32_5 = arith.constant 0 : i32
    %12 = arith.cmpi ne, %11, %c0_i32_5 : i32
    scf.if %12 {
      %c0_7 = arith.constant 0 : index
      %c0_8 = arith.constant 0 : index
      %15 = vector.load %arg4[%c0_7, %c0_8] : memref<8x128xf32, #tpu.memory_space<vmem>>, vector<8x128xf32>
      %16 = vector.shape_cast %6 : vector<16x128xf32> to vector<2x8x128xf32>
      %cst = arith.constant dense<0.000000e+00> : vector<8x128xf32>
      %17 = vector.multi_reduction <add>, %16, %cst [0] : vector<2x8x128xf32> to vector<8x128xf32>
      %18 = arith.addf %15, %17 : vector<8x128xf32>
      %c0_9 = arith.constant 0 : index
      %c0_10 = arith.constant 0 : index
      %19 = vector.load %arg4[%c0_9, %c0_10] : memref<8x128xf32, #tpu.memory_space<vmem>>, vector<8x128xf32>
      tpu.vector_store %arg4[%c0_9, %c0_10], %18 {strides = array<i32>} : memref<8x128xf32, #tpu.memory_space<vmem>>, vector<8x128xf32>,
    } else {
    }
    %13 = arith.extui %9 : i1 to i32
    %c0_i32_6 = arith.constant 0 : i32
    %14 = arith.cmpi ne, %13, %c0_i32_6 : i32
    scf.if %14 {
      %15 = tpu.iota {dimensions = array<i32: 0>} : vector<16x128xi32>
      %c16_i32 = arith.constant 16 : i32
      %16 = arith.muli %8, %c16_i32 : i32
      %17 = vector.broadcast %16 : i32 to vector<16x128xi32>
      %18 = arith.addi %15, %17 : vector<16x128xi32>
      %c16_i32_7 = arith.constant 16 : i32
      %19 = vector.broadcast %c16_i32_7 : i32 to vector<16x128xi32>
      %20 = arith.cmpi slt, %18, %19 : vector<16x128xi32>
      %cst = arith.constant 0.000000e+00 : f32
      %21 = vector.broadcast %cst : f32 to vector<16x128xf32>
      %22 = arith.select %20, %6, %21 : vector<16x128xi1>, vector<16x128xf32>
      %c0_8 = arith.constant 0 : index
      %c0_9 = arith.constant 0 : index
      %23 = vector.load %arg4[%c0_8, %c0_9] : memref<8x128xf32, #tpu.memory_space<vmem>>, vector<8x128xf32>
      %24 = vector.shape_cast %22 : vector<16x128xf32> to vector<2x8x128xf32>
      %cst_10 = arith.constant dense<0.000000e+00> : vector<8x128xf32>
      %25 = vector.multi_reduction <add>, %24, %cst_10 [0] : vector<2x8x128xf32> to vector<8x128xf32>
      %26 = arith.addf %23, %25 : vector<8x128xf32>
      %c0_11 = arith.constant 0 : index
      %c0_12 = arith.constant 0 : index
      %27 = vector.load %arg4[%c0_11, %c0_12] : memref<8x128xf32, #tpu.memory_space<vmem>>, vector<8x128xf32>
      tpu.vector_store %arg4[%c0_11, %c0_12], %26 {strides = array<i32>} : memref<8x128xf32, #tpu.memory_space<vmem>>, vector<8x128xf32>,
    } else {
    }
    return
  }
  func.func @transform_0(%arg0: i32, %arg1: i32) -> (i32, i32) {
    %c1_i32 = arith.constant 1 : i32
    %0 = arith.muli %arg0, %c1_i32 : i32
    %1 = arith.addi %0, %arg1 : i32
    %c0_i32 = arith.constant 0 : i32
    %2 = arith.minsi %1, %c0_i32 : i32
    %c0_i32_0 = arith.constant 0 : i32
    %c0_i32_1 = arith.constant 0 : i32
    return %2, %c0_i32_0 : i32, i32
  }
  func.func @transform_1(%arg0: i32, %arg1: i32) -> (i32, i32) {
    %c1_i32 = arith.constant 1 : i32
    %0 = arith.muli %arg0, %c1_i32 : i32
    %1 = arith.addi %0, %arg1 : i32
    %c0_i32 = arith.constant 0 : i32
    %2 = arith.minsi %1, %c0_i32 : i32
    %c0_i32_0 = arith.constant 0 : i32
    %c0_i32_1 = arith.constant 0 : i32
    return %2, %c0_i32_0 : i32, i32
  }
  func.func @transform_2(%arg0: i32, %arg1: i32) -> (i32, i32) {
    %c0_i32 = arith.constant 0 : i32
    %c0_i32_0 = arith.constant 0 : i32
    return %arg0, %c0_i32 : i32, i32
  }
}

</mosaic_0001>

<llo_original>
// kernel: tpu_custom_call.1
$region0: #{tpu_custom_call.1}
  #allocation0 [shape = 'u32[]', space=smem, size = 0x4, offset = 0x4, fixed_abs, tag = 'smem constant byte address 0x4 - core index']
  #allocation1 [shape = 'u32[72,128]{1,0:T(1,128)}', space=vmem, size = 0x9000, scoped, tag = 'internal scratch']
  %s0 = inlined_call_operand.hbm [shape: f32[16,128], index: 0, kind: input, shape index: {}]
  %s1 = inlined_call_operand.hbm [shape: f32[16,128], index: 1, kind: input, shape index: {}]
  %s2 = inlined_call_operand.hbm [shape: f32[16,128], index: 2, kind: output, shape index: {}]
  %s3 = sld [smem:[#allocation0]]
  $region61: #{tpu_custom_call.1} parent=0
    _
  %s5 = ssub.s32 1, %s3
  %s6 = scalar_select 0, %s5, %s3
  $region1: #{tpu_custom_call.1} parent=0
    #allocation2 [shape = 'u8[16384]{0}', space=vmem, size = 0x4000, scoped, tag = 'input window, operand 0']
    #allocation3 [shape = 's32[2]{0}', space=sflag, size = 0x8, scoped, tag = 'scoped memory for tpu_custom_call.1']
    #allocation4 [shape = 's32[2]{0}', space=sflag, size = 0x8, scoped, tag = 'scoped memory for tpu_custom_call.1']
    #allocation5 [shape = 'u8[16384]{0}', space=vmem, size = 0x4000, scoped, tag = 'input window, operand 1']
    #allocation6 [shape = 's32[2]{0}', space=sflag, size = 0x8, scoped, tag = 'scoped memory for tpu_custom_call.1']
    #allocation7 [shape = 'u8[8192]{0}', space=vmem, size = 0x2000, scoped, tag = 'output window, operand 0']
    %7 = vsyncpa [#allocation3], 0
    %s8 = scalar_lea.sflag [#allocation3], 1
    %9 = vsyncpa %s8, 0
    %10 = vsyncpa [#allocation6], 0
    %s11 = scalar_lea.sflag [#allocation6], 1
    %12 = vsyncpa %s11, 0
    %13 = vsyncpa [#allocation4], 0
    %s14 = scalar_lea.sflag [#allocation4], 1
    %15 = vsyncpa %s14, 0
    loop: start=0, step=1, limit=4
    $region2: #{tpu_custom_call.1} parent=1 // loop_pre_header
      _
    $region3: #{tpu_custom_call.1} parent=1 // loop_header
      %s17 = sphi 0, %s21
      %p18 = scmp.ge.s32.totalorder %s17, 4
      %s24 = sphi 0, %s36
      %s25 = sphi 0, %s32
      %s26 = sphi 0, %s24
      %s27 = sphi 0, %s25
      %s28 = sphi 0, %s26
      %s29 = sphi 0, %s27
      %s45 = sphi 0, %s47
      %s48 = sphi 0, %s45
      %s49 = sphi 0, %s48
      %s65 = sphi 0, %s49
      %s77 = sphi 0, %s79
      %s80 = sphi 0, %s77
      %s81 = sphi 0, %s80
      %s97 = sphi 0, %s81
      %s103 = sphi 0, %s105
      %s106 = sphi 0, %s103
      %s107 = sphi 0, %s106
      %s123 = sphi 0, %s107
    $region4: #{tpu_custom_call.1} parent=1 // loop_header_branch
      %20 = sbr.rel (%p18) target = $region8
    $region5: #{tpu_custom_call.1} parent=1 // loop_body
      %s22 = ssub.s32 %s17, 1
      %s23 = ssub.s32 %s17, 2
      %s30 = sadd.s32 1, %s25
      %p31 = scmp.ge.s32.totalorder %s30, 1
      %s32 = scalar_select %p31, 0, %s30
      %s33 = sadd.s32 1, %s24
      %s34 = scalar_select %p31, %s33, %s24
      %p35 = scmp.ge.s32.totalorder %s34, 2
      %s36 = scalar_select %p35, 0, %s34
      %s37 = sadd.s32 %s24, %s25
      %p38 = scmp.lt.s32.totalorder %s37, 0
      %s39 = scalar_select %p38, %s37, 0
      %s40 = sadd.s32 %s36, %s32
      %p41 = scmp.lt.s32.totalorder %s40, 0
      %s42 = scalar_select %p41, %s40, 0
      %s43 = ssub.s32 %s39, %s42
      %p44 = scmp.eq.s32.totalorder %s43, 0
      %s46 = sadd.s32 %s45, 1
      %s47 = scalar_select %p44, %s45, %s46
      %p50 = pneg %p44
      %p51 = scmp.eq.s32.totalorder %s17, 1
      %p52 = por %p50, %p51
      %p53 = scmp.ne.s32.totalorder %s45, %s48
      %p54 = scmp.eq.s32.totalorder %s17, 0
      %p55 = por %p53, %p54
      %p56 = scmp.ne.s32.totalorder %s45, %s48
      %p57 = scmp.eq.s32.totalorder %s22, 1
      %p58 = por %p56, %p57
      %p59 = scmp.ne.s32.totalorder %s48, %s49
      %p60 = scmp.eq.s32.totalorder %s22, 0
      %p61 = por %p59, %p60
      %p62 = scmp.ne.s32.totalorder %s48, %s49
      %p63 = scmp.eq.s32.totalorder %s23, 1
      %p64 = por %p62, %p63
      %p66 = scmp.ne.s32.totalorder %s49, %s65
      %p67 = scmp.eq.s32.totalorder %s23, 0
      %p68 = por %p66, %p67
      %s69 = sadd.s32 %s24, %s25
      %p70 = scmp.lt.s32.totalorder %s69, 0
      %s71 = scalar_select %p70, %s69, 0
      %s72 = sadd.s32 %s36, %s32
      %p73 = scmp.lt.s32.totalorder %s72, 0
      %s74 = scalar_select %p73, %s72, 0
      %s75 = ssub.s32 %s71, %s74
      %p76 = scmp.eq.s32.totalorder %s75, 0
      %s78 = sadd.s32 %s77, 1
      %s79 = scalar_select %p76, %s77, %s78
      %p82 = pneg %p76
      %p83 = scmp.eq.s32.totalorder %s17, 1
      %p84 = por %p82, %p83
      %p85 = scmp.ne.s32.totalorder %s77, %s80
      %p86 = scmp.eq.s32.totalorder %s17, 0
      %p87 = por %p85, %p86
      %p88 = scmp.ne.s32.totalorder %s77, %s80
      %p89 = scmp.eq.s32.totalorder %s22, 1
      %p90 = por %p88, %p89
      %p91 = scmp.ne.s32.totalorder %s80, %s81
      %p92 = scmp.eq.s32.totalorder %s22, 0
      %p93 = por %p91, %p92
      %p94 = scmp.ne.s32.totalorder %s80, %s81
      %p95 = scmp.eq.s32.totalorder %s23, 1
      %p96 = por %p94, %p95
      %p98 = scmp.ne.s32.totalorder %s81, %s97
      %p99 = scmp.eq.s32.totalorder %s23, 0
      %p100 = por %p98, %p99
      %s101 = ssub.s32 %s24, %s36
      %p102 = scmp.eq.s32.totalorder %s101, 0
      %s104 = sadd.s32 %s103, 1
      %s105 = scalar_select %p102, %s103, %s104
      %p108 = pneg %p102
      %p109 = scmp.eq.s32.totalorder %s17, 1
      %p110 = por %p108, %p109
      %p111 = scmp.ne.s32.totalorder %s103, %s106
      %p112 = scmp.eq.s32.totalorder %s17, 0
      %p113 = por %p111, %p112
      %p114 = scmp.ne.s32.totalorder %s103, %s106
      %p115 = scmp.eq.s32.totalorder %s22, 1
      %p116 = por %p114, %p115
      %p117 = scmp.ne.s32.totalorder %s106, %s107
      %p118 = scmp.eq.s32.totalorder %s22, 0
      %p119 = por %p117, %p118
      %p120 = scmp.ne.s32.totalorder %s106, %s107
      %p121 = scmp.eq.s32.totalorder %s23, 1
      %p122 = por %p120, %p121
      %p124 = scmp.ne.s32.totalorder %s107, %s123
      %p125 = scmp.eq.s32.totalorder %s23, 0
      %p126 = por %p124, %p125
      %p127 = scmp.le.s32.totalorder 1, %s17
      %p128 = scmp.lt.s32.totalorder %s17, 3
      %p129 = pnand %p127, %p128
      %p130 = pneg %p129
      // Predicated region
      $region9: #{tpu_custom_call.1} parent=5 // pred_check
        _
      $region10: #{tpu_custom_call.1} parent=5 // pred_check_branch
        %132 = sbr.rel (%p129) target = $region12
      $region11: #{tpu_custom_call.1} parent=5 // pred_region
        %s133 = ssub.s32 %s17, 1
      $region12: #{tpu_custom_call.1} parent=5 // pred_fallthru
        _
      %p134 = scmp.lt.s32.totalorder %s17, 2
      // Predicated region
      $region13: #{tpu_custom_call.1} parent=5 // pred_check
        %p135 = pneg %p134
      $region14: #{tpu_custom_call.1} parent=5 // pred_check_branch
        %137 = sbr.rel (%p135) target = $region16
      $region15: #{tpu_custom_call.1} parent=5 // pred_region
        // Predicated region
        $region17: #{tpu_custom_call.1} parent=15 // pred_check
          %p138 = pneg %p55
        $region18: #{tpu_custom_call.1} parent=15 // pred_check_branch
          %140 = sbr.rel (%p138) target = $region20
        $region19: #{tpu_custom_call.1} parent=15 // pred_region
          %s141 = sand.u32 %s45, 1
          %s142 = scalar_lea.sflag [#allocation3], %s141
          %s143 = sand.u32 %s45, 1
          %s144 = smul.addr %s143, 16
          %s145 = scalar_lea.vmem [#allocation2], %s144
          %s146 = sadd.s32 %s24, %s25
          %p147 = scmp.lt.s32.totalorder %s146, 0
          %s148 = scalar_select %p147, %s146, 0
          %s149 = smul.u32 2, %s148
          %151 = vsyncadd %s142, 0
          %s152 = smul.addr %s149, 8
          %s153 = scalar_lea.hbm %s0, %s152
          %s154 = sshll.u32 %s153, 4
          %s155 = int_to_ptr.hbm [resolvable:$true] %s154
          %s156 = sshll.u32 %s145, 4
          %s157 = int_to_ptr.vmem [resolvable:$true] %s156
          %162 = dma.hbm_to_vmem [thread:$0]  %s155, 256, %s157, %s142, 128, 128, 8
        $region20: #{tpu_custom_call.1} parent=15 // pred_fallthru
          _
        // Predicated region
        $region21: #{tpu_custom_call.1} parent=15 // pred_check
          %p163 = pneg %p87
        $region22: #{tpu_custom_call.1} parent=15 // pred_check_branch
          %165 = sbr.rel (%p163) target = $region24
        $region23: #{tpu_custom_call.1} parent=15 // pred_region
          %s166 = sand.u32 %s77, 1
          %s167 = scalar_lea.sflag [#allocation6], %s166
          %s168 = sand.u32 %s77, 1
          %s169 = smul.addr %s168, 16
          %s170 = scalar_lea.vmem [#allocation5], %s169
          %s171 = sadd.s32 %s24, %s25
          %p172 = scmp.lt.s32.totalorder %s171, 0
          %s173 = scalar_select %p172, %s171, 0
          %s174 = smul.u32 2, %s173
          %176 = vsyncadd %s167, 0
          %s177 = smul.addr %s174, 8
          %s178 = scalar_lea.hbm %s1, %s177
          %s179 = sshll.u32 %s178, 4
          %s180 = int_to_ptr.hbm [resolvable:$true] %s179
          %s181 = sshll.u32 %s170, 4
          %s182 = int_to_ptr.vmem [resolvable:$true] %s181
          %187 = dma.hbm_to_vmem [thread:$0]  %s180, 256, %s182, %s167, 128, 128, 8
        $region24: #{tpu_custom_call.1} parent=15 // pred_fallthru
          _
      $region16: #{tpu_custom_call.1} parent=5 // pred_fallthru
        _
      %p188 = scmp.le.s32.totalorder 1, %s17
      %p189 = scmp.lt.s32.totalorder %s17, 3
      %p190 = pnand %p188, %p189
      %p191 = pneg %p190
      // Predicated region
      $region25: #{tpu_custom_call.1} parent=5 // pred_check
        _
      $region26: #{tpu_custom_call.1} parent=5 // pred_check_branch
        %193 = sbr.rel (%p190) target = $region28
      $region27: #{tpu_custom_call.1} parent=5 // pred_region
        %s194 = ssub.s32 %s17, 1
        %s195 = sand.u32 %s48, 1
        %s196 = scalar_lea.sflag [#allocation3], %s195
        %s197 = sand.u32 %s48, 1
        %s198 = smul.addr %s197, 16
        %s199 = scalar_lea.vmem [#allocation2], %s198
        // Predicated region
        $region29: #{tpu_custom_call.1} parent=27 // pred_check
          %p200 = pneg %p61
        $region30: #{tpu_custom_call.1} parent=27 // pred_check_branch
          %202 = sbr.rel (%p200) target = $region32
        $region31: #{tpu_custom_call.1} parent=27 // pred_region
          %204 = dma.done %s196, 256
        $region32: #{tpu_custom_call.1} parent=27 // pred_fallthru
          _
        %s205 = sand.u32 %s80, 1
        %s206 = scalar_lea.sflag [#allocation6], %s205
        %s207 = sand.u32 %s80, 1
        %s208 = smul.addr %s207, 16
        %s209 = scalar_lea.vmem [#allocation5], %s208
        // Predicated region
        $region33: #{tpu_custom_call.1} parent=27 // pred_check
          %p210 = pneg %p93
        $region34: #{tpu_custom_call.1} parent=27 // pred_check_branch
          %212 = sbr.rel (%p210) target = $region36
        $region35: #{tpu_custom_call.1} parent=27 // pred_region
          %214 = dma.done %s206, 256
        $region36: #{tpu_custom_call.1} parent=27 // pred_fallthru
          _
        %s215 = sand.u32 %s48, 1
        %s216 = scalar_lea.sflag [#allocation3], %s215
        %s217 = sand.u32 %s48, 1
        %s218 = smul.addr %s217, 16
        %s219 = scalar_lea.vmem [#allocation2], %s218
        %p220 = pneg %p61
        %p221 = pneg %p58
        %s222 = sand.u32 %s80, 1
        %s223 = scalar_lea.sflag [#allocation6], %s222
        %s224 = sand.u32 %s80, 1
        %s225 = smul.addr %s224, 16
        %s226 = scalar_lea.vmem [#allocation5], %s225
        %p227 = pneg %p93
        %p228 = pneg %p90
        %p229 = pneg %p119
        %p230 = pneg %p116
        %s231 = sand.u32 %s106, 1
        %s232 = scalar_lea.sflag [#allocation4], %s231
        %s233 = sand.u32 %s106, 1
        %s234 = smul.addr %s233, 8
        %s235 = scalar_lea.vmem [#allocation7], %s234
        %s236 = sadd.s32 %s26, %s27
        %p237 = scmp.lt.s32.totalorder %s236, 0
        %s238 = scalar_select %p237, %s236, 0
        %s239 = smul.u32 2, %s238
        %s240 = sadd.s32 %s26, %s27
        %p241 = scmp.lt.s32.totalorder %s240, 0
        %s242 = scalar_select %p241, %s240, 0
        %s243 = smul.u32 2, %s242
        %p244 = scmp.eq.s32.totalorder %s27, 0
        // Predicated region
        $region37: #{tpu_custom_call.1} parent=27 // pred_check
          %p245 = pneg %p244
        $region38: #{tpu_custom_call.1} parent=27 // pred_check_branch
          %247 = sbr.rel (%p245) target = $region40
        $region39: #{tpu_custom_call.1} parent=27 // pred_region
          %248 = vst [vmem:[%s235] sm:$0xff] 0.0
        $region40: #{tpu_custom_call.1} parent=27 // pred_fallthru
          _
        %v249 = vld [vmem:[%s199] sm:$0xff]
        %v250 = vld [vmem:[%s199 + $0x8] sm:$0xff]
        %v251 = vld [vmem:[%s209] sm:$0xff]
        %v252 = vld [vmem:[%s209 + $0x8] sm:$0xff]
        %v253 = vsub.f32 %v249, %v251
        %v254 = vsub.f32 %v250, %v252
        %v255 = vand.u32 2147483647, %v253
        %v256 = vand.u32 2147483647, %v254
        %s257 = sadd.s32 %s26, %s27
        %p258 = scmp.ge.s32.totalorder %s257, 0
        %p259 = scmp.lt.s32.totalorder %s257, 0
        // Predicated region
        $region41: #{tpu_custom_call.1} parent=27 // pred_check
          %p260 = pneg %p259
        $region42: #{tpu_custom_call.1} parent=27 // pred_check_branch
          %262 = sbr.rel (%p260) target = $region44
        $region43: #{tpu_custom_call.1} parent=27 // pred_region
          %v263 = vld [vmem:[%s235] sm:$0xff]
          %v264 = vadd.f32 %v255, %v256
          %v265 = vadd.f32 %v263, %v264
          %266 = vst [vmem:[%s235] sm:$0xff] %v265
        $region44: #{tpu_custom_call.1} parent=27 // pred_fallthru
          _
        // Predicated region
        $region45: #{tpu_custom_call.1} parent=27 // pred_check
          %p267 = pneg %p258
        $region46: #{tpu_custom_call.1} parent=27 // pred_check_branch
          %269 = sbr.rel (%p267) target = $region48
        $region47: #{tpu_custom_call.1} parent=27 // pred_region
          %v270 = vlaneseq
          %v271 = vshrl.u32 %v270, 7
          %v272 = vadd.s32 %v271, 8
          %s273 = smul.u32 %s257, 16
          %v274 = vstv %s273
          %v275 = vadd.s32 %v271, %v274
          %v276 = vadd.s32 %v272, %v274
          %vm277 = vcmp.lt.s32.totalorder %v275, 16
          %vm278 = vcmp.lt.s32.totalorder %v276, 16
          %v279 = vsel %vm277, %v255, 0.0
          %v280 = vsel %vm278, %v256, 0.0
          %v281 = vld [vmem:[%s235] sm:$0xff]
          %v282 = vadd.f32 %v279, %v280
          %v283 = vadd.f32 %v281, %v282
          %284 = vst [vmem:[%s235] sm:$0xff] %v283
        $region48: #{tpu_custom_call.1} parent=27 // pred_fallthru
          _
        %s285 = sand.u32 %s106, 1
        %s286 = scalar_lea.sflag [#allocation4], %s285
        %s287 = sand.u32 %s106, 1
        %s288 = smul.addr %s287, 8
        %s289 = scalar_lea.vmem [#allocation7], %s288
        // Predicated region
        $region49: #{tpu_custom_call.1} parent=27 // pred_check
          %p290 = pneg %p116
        $region50: #{tpu_custom_call.1} parent=27 // pred_check_branch
          %292 = sbr.rel (%p290) target = $region52
        $region51: #{tpu_custom_call.1} parent=27 // pred_region
          %294 = vsyncadd %s286, 0
          %s295 = smul.addr %s26, 8
          %s296 = scalar_lea.hbm %s2, %s295
          %s298 = sshll.u32 %s289, 4
          %s299 = int_to_ptr.vmem [resolvable:$true] %s298
          %s300 = sshll.u32 %s296, 4
          %s301 = int_to_ptr.hbm [resolvable:$true] %s300
          %303 = dma.vmem_to_hbm [thread:$0]  %s299, 128, %s301, %s286
        $region52: #{tpu_custom_call.1} parent=27 // pred_fallthru
          _
      $region28: #{tpu_custom_call.1} parent=5 // pred_fallthru
        _
      %p304 = scmp.le.s32.totalorder 2, %s17
      // Predicated region
      $region53: #{tpu_custom_call.1} parent=5 // pred_check
        %p305 = pneg %p304
      $region54: #{tpu_custom_call.1} parent=5 // pred_check_branch
        %307 = sbr.rel (%p305) target = $region56
      $region55: #{tpu_custom_call.1} parent=5 // pred_region
        %s308 = ssub.s32 %s17, 2
        // Predicated region
        $region57: #{tpu_custom_call.1} parent=55 // pred_check
          %p309 = pneg %p122
        $region58: #{tpu_custom_call.1} parent=55 // pred_check_branch
          %311 = sbr.rel (%p309) target = $region60
        $region59: #{tpu_custom_call.1} parent=55 // pred_region
          %s312 = sand.u32 %s107, 1
          %s313 = scalar_lea.sflag [#allocation4], %s312
          %s314 = sand.u32 %s107, 1
          %s315 = smul.addr %s314, 8
          %s316 = scalar_lea.vmem [#allocation7], %s315
          %318 = dma.done %s313, 128
        $region60: #{tpu_custom_call.1} parent=55 // pred_fallthru
          _
      $region56: #{tpu_custom_call.1} parent=5 // pred_fallthru
        _
    $region6: #{tpu_custom_call.1} parent=1 // loop_footer
      %s21 = sadd.s32 1, %s17
    $region7: #{tpu_custom_call.1} parent=1 // loop_footer_branch
      %16 = sbr.rel target = $region3
    $region8: #{tpu_custom_call.1} parent=1 // loop_exit
      _
    %319 = vsyncpa [#allocation3], 1
    %s320 = scalar_lea.sflag [#allocation3], 1
    %321 = vsyncpa %s320, 1
    %322 = vsyncpa [#allocation6], 1
    %s323 = scalar_lea.sflag [#allocation6], 1
    %324 = vsyncpa %s323, 1
    %325 = vsyncpa [#allocation4], 1
    %s326 = scalar_lea.sflag [#allocation4], 1
    %327 = vsyncpa %s326, 1

</llo_original>
